<compile_context>
chip_gen: v6e
topology: v6e:2x2x1
jax: 0.10.0
libtpu: 0.0.40
codegen_flags: <defaults>
</compile_context>

<pallas_src>
import functools

import jax
import jax.numpy as jnp
from jax.experimental import pallas as pl
from jax.experimental.pallas import tpu as pltpu


def _gelu_tanh(x):
    # tanh-approximate GELU (EUP-friendly inside the kernel).
    # TODO(synk): PyTorch nn.GELU defaults to the exact erf form; the tanh
    # approximation differs by <~1e-3 absolute.
    c = 0.7978845608028654  # sqrt(2/pi)
    return 0.5 * x * (1.0 + jnp.tanh(c * (x + 0.044715 * x * x * x)))


def _linear_kernel(x_ref, w_ref, b_ref, o_ref, acc_ref, *, activation):
    """One (tm, tn) output tile of y = act(x @ w.T + b).

    grid = (M//tm, N//tn, K//tk); k (axis 2) is the reduction axis.
      x_ref: (tm, tk)   activation tile          (block index (i, k))
      w_ref: (tn, tk)   weight tile, (out, in)   (block index (j, k))
      b_ref: (1, tn)    bias tile                (block index (0, j))
      o_ref: (tm, tn)   output tile              (block index (i, j))
      acc_ref: (tm, tn) f32 VMEM accumulator, resident across k.
    """
    @pl.when(pl.program_id(2) == 0)
    def _init():
        acc_ref[...] = jnp.zeros_like(acc_ref)

    # Contract last dim of x with last dim of w (i.e. x @ w.T) -> (tm, tn).
    acc_ref[...] += jax.lax.dot_general(
        x_ref[...], w_ref[...],
        dimension_numbers=(((1,), (1,)), ((), ())),
        preferred_element_type=jnp.float32)

    @pl.when(pl.program_id(2) == pl.num_programs(2) - 1)
    def _finalize():
        y = acc_ref[...] + b_ref[...].astype(jnp.float32)
        if activation is not None:
            y = activation(y)
        o_ref[...] = y.astype(o_ref.dtype)


def _pick_tile(size, target, align):
    """Largest `align`-multiple divisor of `size` that is <= target, else full extent."""
    if size <= target:
        return size
    t = (target // align) * align
    while t >= align:
        if size % t == 0:
            return t
        t -= align
    return size


def linear_pallas(x, w, b, *, activation=None, out_dtype=None,
                  mxu_dtype=jnp.bfloat16,
                  tm_target=256, tn_target=512, tk_target=512):
    """y = activation(x @ w.T + b) with PyTorch-layout w of shape (N_out, K_in)."""
    M, K = x.shape
    N, K2 = w.shape
    assert K == K2 and b.shape == (N,)
    out_dtype = x.dtype if out_dtype is None else out_dtype

    # bf16 MXU inputs (halves weight/activation HBM+VMEM traffic); f32 accumulate.
    xq = x.astype(mxu_dtype)
    wq = w.astype(mxu_dtype)
    b2d = b.reshape(1, N).astype(jnp.float32)

    sublane = 16 if jnp.dtype(mxu_dtype).itemsize == 2 else 8
    tm = _pick_tile(M, tm_target, sublane)   # rows (sublane axis)
    tn = _pick_tile(N, tn_target, 128)       # output features (lane axis)
    tk = _pick_tile(K, tk_target, 128)       # contraction

    in_b = jnp.dtype(mxu_dtype).itemsize
    out_b = jnp.dtype(out_dtype).itemsize
    # double-buffered in/out tiles + f32 accumulator; clamp for v7x's 64 MiB VMEM.
    working = (2 * (tm * tk + tn * tk) * in_b + 2 * tn * 4
               + 2 * tm * tn * out_b + tm * tn * 4)
    vmem_limit = int(min(max(2 * working, 32 * 1024 * 1024), 48 * 1024 * 1024))

    cost = pl.CostEstimate(
        flops=2 * M * N * K,
        transcendentals=M * N if activation is not None else 0,
        bytes_accessed=M * K * in_b + N * K * in_b + N * 4 + M * N * out_b)

    kernel = functools.partial(_linear_kernel, activation=activation)

    return pl.pallas_call(
        kernel,
        out_shape=jax.ShapeDtypeStruct((M, N), out_dtype),
        grid_spec=pltpu.PrefetchScalarGridSpec(
            num_scalar_prefetch=0,
            grid=(M // tm, N // tn, K // tk),
            in_specs=[
                pl.BlockSpec((tm, tk), lambda i, j, k: (i, k)),   # activations
                pl.BlockSpec((tn, tk), lambda i, j, k: (j, k)),   # weight (out, in)
                pl.BlockSpec((1, tn), lambda i, j, k: (0, j)),    # bias
            ],
            out_specs=pl.BlockSpec((tm, tn), lambda i, j, k: (i, j)),
            scratch_shapes=[pltpu.VMEM((tm, tn), jnp.float32)],
        ),
        compiler_params=pltpu.CompilerParams(
            dimension_semantics=("parallel", "parallel", "arbitrary"),
            vmem_limit_bytes=vmem_limit),
        cost_estimate=cost,
    )(xq, wq, b2d)


def feed_forward(x, w1, b1, w2, b2, *, mxu_dtype=jnp.bfloat16):
    """FeedForward.forward: Linear(dim,hidden) -> GELU -> Dropout(0) -> Linear(hidden,dim) -> Dropout(0).

    Weights are in PyTorch Linear layout (out_features, in_features); y = x @ W.T + b.
    Dropout with p=0.0 is the identity.
    # TODO(synk): non-zero dropout would need pltpu.prng_seed + pltpu.stateful_bernoulli.
    """
    B, S, D = x.shape
    x2d = x.reshape(B * S, D)
    # Hidden activations stay in bf16 between the two GEMMs (halves traffic).
    h = linear_pallas(x2d, w1, b1, activation=_gelu_tanh,
                      out_dtype=mxu_dtype, mxu_dtype=mxu_dtype)
    y = linear_pallas(h, w2, b2, activation=None,
                      out_dtype=x.dtype, mxu_dtype=mxu_dtype)
    return y.reshape(B, S, D)


if __name__ == "__main__":
    batch, seq, dim, hidden_dim = 2, 8, 32, 64

    key = jax.random.PRNGKey(0)
    kx, kw1, kb1, kw2, kb2 = jax.random.split(key, 5)

    x = jax.random.normal(kx, (batch, seq, dim), dtype=jnp.float32)
    # PyTorch-layout parameters: w (out, in), b (out,)
    w1 = jax.random.normal(kw1, (hidden_dim, dim), dtype=jnp.float32) * 0.1
    b1 = jax.random.normal(kb1, (hidden_dim,), dtype=jnp.float32) * 0.1
    w2 = jax.random.normal(kw2, (dim, hidden_dim), dtype=jnp.float32) * 0.1
    b2 = jax.random.normal(kb2, (dim,), dtype=jnp.float32) * 0.1

    out = jax.block_until_ready(feed_forward(x, w1, b1, w2, b2))

    # Plain-JAX reference (f32, tanh-GELU to match the kernel's activation).
    h_ref = jax.nn.gelu(jnp.einsum("bsd,hd->bsh", x, w1) + b1, approximate=True)
    ref = jnp.einsum("bsh,dh->bsd", h_ref, w2) + b2

    assert out.shape == (batch, seq, dim)
    assert jnp.allclose(out, ref, atol=3e-2, rtol=3e-2), float(
        jnp.max(jnp.abs(out - ref)))

    print("KERNEL_OK")
</pallas_src>

<mosaic_0001>
module attributes {stable_mosaic.version = 11 : i64} {
  func.func @_linear_kernel(%arg0: i32, %arg1: i32, %arg2: i32, %arg3: memref<16x32xbf16, #tpu.memory_space<vmem>>, %arg4: memref<64x32xbf16, #tpu.memory_space<vmem>>, %arg5: memref<1x64xf32, #tpu.memory_space<vmem>>, %arg6: memref<16x64xbf16, #tpu.memory_space<vmem>>, %arg7: memref<16x64xf32, #tpu.memory_space<vmem>>) attributes {dimension_semantics = [#tpu.dimension_semantics<parallel>, #tpu.dimension_semantics<parallel>, #tpu.dimension_semantics<arbitrary>], iteration_bounds = array<i64: 1, 1, 1>, scalar_prefetch = 0 : i64, scratch_operands = 1 : i64, tpu.core_type = #tpu.core_type<tc>, window_params = [{transform_indices = @transform_0, window_bounds = array<i64: 16, 32>}, {transform_indices = @transform_1, window_bounds = array<i64: 64, 32>}, {transform_indices = @transform_2, window_bounds = array<i64: 1, 64>}, {transform_indices = @transform_3, window_bounds = array<i64: 16, 64>}]} {
    %c0_i32 = arith.constant 0 : i32
    %0 = arith.cmpi eq, %arg2, %c0_i32 : i32
    %1 = arith.extui %0 : i1 to i32
    %c0_i32_0 = arith.constant 0 : i32
    %2 = arith.cmpi ne, %1, %c0_i32_0 : i32
    scf.if %2 {
      %cst_10 = arith.constant 0.000000e+00 : f32
      %12 = vector.broadcast %cst_10 : f32 to vector<16x64xf32>
      %c0_11 = arith.constant 0 : index
      %c0_12 = arith.constant 0 : index
      %13 = vector.load %arg7[%c0_11, %c0_12] : memref<16x64xf32, #tpu.memory_space<vmem>>, vector<16x64xf32>
      tpu.vector_store %arg7[%c0_11, %c0_12], %12 {strides = array<i32>} : memref<16x64xf32, #tpu.memory_space<vmem>>, vector<16x64xf32>,
    } else {
    }
    %c0 = arith.constant 0 : index
    %c0_1 = arith.constant 0 : index
    %3 = vector.load %arg7[%c0, %c0_1] : memref<16x64xf32, #tpu.memory_space<vmem>>, vector<16x64xf32>
    %c0_2 = arith.constant 0 : index
    %c0_3 = arith.constant 0 : index
    %4 = vector.load %arg3[%c0_2, %c0_3] : memref<16x32xbf16, #tpu.memory_space<vmem>>, vector<16x32xbf16>
    %c0_4 = arith.constant 0 : index
    %c0_5 = arith.constant 0 : index
    %5 = vector.load %arg4[%c0_4, %c0_5] : memref<64x32xbf16, #tpu.memory_space<vmem>>, vector<64x32xbf16>
    %cst = arith.constant dense<0.000000e+00> : vector<16x64xf32>
    %6 = tpu.matmul %4, %5, %cst {dimension_numbers = #tpu.dot_dimension_numbers<[1], [1], [0], [0], [0, 0, 1, 0], [], []>} : vector<16x32xbf16>, vector<64x32xbf16>, vector<16x64xf32> -> vector<16x64xf32>
    %7 = arith.addf %3, %6 : vector<16x64xf32>
    %c0_6 = arith.constant 0 : index
    %c0_7 = arith.constant 0 : index
    %8 = vector.load %arg7[%c0_6, %c0_7] : memref<16x64xf32, #tpu.memory_space<vmem>>, vector<16x64xf32>
    tpu.vector_store %arg7[%c0_6, %c0_7], %7 {strides = array<i32>} : memref<16x64xf32, #tpu.memory_space<vmem>>, vector<16x64xf32>,
    %c0_i32_8 = arith.constant 0 : i32
    %9 = arith.cmpi eq, %arg2, %c0_i32_8 : i32
    %10 = arith.extui %9 : i1 to i32
    %c0_i32_9 = arith.constant 0 : i32
    %11 = arith.cmpi ne, %10, %c0_i32_9 : i32
    scf.if %11 {
      %c0_10 = arith.constant 0 : index
      %c0_11 = arith.constant 0 : index
      %12 = vector.load %arg7[%c0_10, %c0_11] : memref<16x64xf32, #tpu.memory_space<vmem>>, vector<16x64xf32>
      %c0_12 = arith.constant 0 : index
      %c0_13 = arith.constant 0 : index
      %13 = vector.load %arg5[%c0_12, %c0_13] : memref<1x64xf32, #tpu.memory_space<vmem>>, vector<1x64xf32>
      %14 = vector.broadcast %13 : vector<1x64xf32> to vector<16x64xf32>
      %15 = arith.addf %12, %14 : vector<16x64xf32>
      %cst_14 = arith.constant 5.000000e-01 : f32
      %16 = vector.broadcast %cst_14 : f32 to vector<16x64xf32>
      %17 = arith.mulf %16, %15 : vector<16x64xf32>
      %cst_15 = arith.constant 4.471500e-02 : f32
      %18 = vector.broadcast %cst_15 : f32 to vector<16x64xf32>
      %19 = arith.mulf %18, %15 : vector<16x64xf32>
      %20 = arith.mulf %19, %15 : vector<16x64xf32>
      %21 = arith.mulf %20, %15 : vector<16x64xf32>
      %22 = arith.addf %15, %21 : vector<16x64xf32>
      %cst_16 = arith.constant 0.797884583 : f32
      %23 = vector.broadcast %cst_16 : f32 to vector<16x64xf32>
      %24 = arith.mulf %23, %22 : vector<16x64xf32>
      %25 = math.tanh %24 : vector<16x64xf32>
      %cst_17 = arith.constant 1.000000e+00 : f32
      %26 = vector.broadcast %cst_17 : f32 to vector<16x64xf32>
      %27 = arith.addf %26, %25 : vector<16x64xf32>
      %28 = arith.mulf %17, %27 : vector<16x64xf32>
      %29 = arith.truncf %28 : vector<16x64xf32> to vector<16x64xbf16>
      %c0_18 = arith.constant 0 : index
      %c0_19 = arith.constant 0 : index
      %30 = vector.load %arg6[%c0_18, %c0_19] : memref<16x64xbf16, #tpu.memory_space<vmem>>, vector<16x64xbf16>
      tpu.vector_store %arg6[%c0_18, %c0_19], %29 {strides = array<i32>} : memref<16x64xbf16, #tpu.memory_space<vmem>>, vector<16x64xbf16>,
    } else {
    }
    return
  }
  func.func @transform_0(%arg0: i32, %arg1: i32, %arg2: i32) -> (i32, i32) {
    %c0_i32 = arith.constant 0 : i32
    return %arg0, %arg2 : i32, i32
  }
  func.func @transform_1(%arg0: i32, %arg1: i32, %arg2: i32) -> (i32, i32) {
    %c0_i32 = arith.constant 0 : i32
    return %arg1, %arg2 : i32, i32
  }
  func.func @transform_2(%arg0: i32, %arg1: i32, %arg2: i32) -> (i32, i32) {
    %c0_i32 = arith.constant 0 : i32
    %c0_i32_0 = arith.constant 0 : i32
    return %c0_i32, %arg1 : i32, i32
  }
  func.func @transform_3(%arg0: i32, %arg1: i32, %arg2: i32) -> (i32, i32) {
    %c0_i32 = arith.constant 0 : i32
    return %arg0, %arg1 : i32, i32
  }
}

</mosaic_0001>

<llo_original>
// kernel: tpu_custom_call.1
$region0: #{tpu_custom_call.1}
  #allocation0 [shape = 'u32[]', space=smem, size = 0x4, offset = 0x4, fixed_abs, tag = 'smem constant byte address 0x4 - core index']
  #allocation1 [shape = 'u32[144,128]{1,0:T(1,128)}', space=vmem, size = 0x12000, scoped, tag = 'internal scratch']
  #allocation2 [shape = 'f32[16,64]{1,0:T(8,128)}', space=vmem, size = 0x2000, scoped, tag = 'scratch operand']
  %s0 = inlined_call_operand.vmem [shape: bf16[16,32], index: 0, kind: input, shape index: {}]
  %s1 = inlined_call_operand.vmem [shape: bf16[64,32], index: 1, kind: input, shape index: {}]
  %s2 = inlined_call_operand.vmem [shape: f32[1,64], index: 2, kind: input, shape index: {}]
  %s3 = inlined_call_operand.hbm [shape: bf16[16,64], index: 3, kind: output, shape index: {}]
  %s4 = sld [smem:[#allocation0]]
  $region30: #{tpu_custom_call.1} parent=0
    _
  %s6 = ssub.s32 1, %s4
  %s7 = scalar_select 0, %s6, %s4
  $region1: #{tpu_custom_call.1} parent=0
    #allocation3 [shape = 'u8[4096]{0}', space=vmem, size = 0x1000, scoped, tag = 'output window, operand 0, single buffered']
    #allocation4 [shape = 's32[1]{0}', space=sflag, size = 0x4, scoped, tag = 'scoped memory for tpu_custom_call.1']
    %8 = vsyncpa [#allocation4], 0
    // Predicated region
    $region2: #{tpu_custom_call.1} parent=1 // pred_check
      _
    $region3: #{tpu_custom_call.1} parent=1 // pred_check_branch
      %10 = sbr.rel (0) target = $region5
    $region4: #{tpu_custom_call.1} parent=1 // pred_region
      _
    $region5: #{tpu_custom_call.1} parent=1 // pred_fallthru
      _
    // Predicated region
    $region6: #{tpu_custom_call.1} parent=1 // pred_check
      _
    $region7: #{tpu_custom_call.1} parent=1 // pred_check_branch
      %12 = sbr.rel (0) target = $region9
    $region8: #{tpu_custom_call.1} parent=1 // pred_region
      _
    $region9: #{tpu_custom_call.1} parent=1 // pred_fallthru
      _
    // Predicated region
    $region10: #{tpu_custom_call.1} parent=1 // pred_check
      _
    $region11: #{tpu_custom_call.1} parent=1 // pred_check_branch
      %14 = sbr.rel (0) target = $region13
    $region12: #{tpu_custom_call.1} parent=1 // pred_region
      _
    $region13: #{tpu_custom_call.1} parent=1 // pred_fallthru
      _
    %p16 = scmp.eq.s32.totalorder 0, 0
    // Predicated region
    $region14: #{tpu_custom_call.1} parent=1 // pred_check
      %p17 = pneg %p16
    $region15: #{tpu_custom_call.1} parent=1 // pred_check_branch
      %19 = sbr.rel (%p17) target = $region17
    $region16: #{tpu_custom_call.1} parent=1 // pred_region
      %vm20 = vcmask 523264
      %21 = vst.msk [vmem:[#allocation2] sm:$0xff] %vm20, 0.0
      %22 = vst.msk [vmem:[#allocation2 + $0x8] sm:$0xff] %vm20, 0.0
    $region17: #{tpu_custom_call.1} parent=1 // pred_fallthru
      _
    %v23 = vld [vmem:[#allocation2] sm:$0xff]
    %v24 = vld [vmem:[#allocation2 + $0x8] sm:$0xff]
    %v25 = vld [vmem:[%s0] sm:$0xf]
    %v26 = vld [vmem:[%s0 + $0x4] sm:$0xf]
    %v27 = vld [vmem:[%s1] sm:$0xf]
    %v28 = vld [vmem:[%s1 + $0x4] sm:$0xf]
    %v29 = vld [vmem:[%s1 + $0x8] sm:$0xf]
    %v30 = vld [vmem:[%s1 + $0xc] sm:$0xf]
    %v31 = vld [vmem:[%s1 + $0x10] sm:$0xf]
    %v32 = vld [vmem:[%s1 + $0x14] sm:$0xf]
    %v33 = vld [vmem:[%s1 + $0x18] sm:$0xf]
    %v34 = vld [vmem:[%s1 + $0x1c] sm:$0xf]
    %v37 = vunpack.c.l.b16 %v25
    %v38 = vunpack.c.l.b16 %v26
    %v39 = vpack.c.b16 %v38, %v37
    %v48 = vunpack.c.l.b16 %v27
    %v49 = vunpack.c.l.b16 %v28
    %v50 = vunpack.c.l.b16 %v29
    %v51 = vunpack.c.l.b16 %v30
    %v52 = vunpack.c.l.b16 %v31
    %v53 = vunpack.c.l.b16 %v32
    %v54 = vunpack.c.l.b16 %v33
    %v55 = vunpack.c.l.b16 %v34
    %v56 = vpack.c.b16 %v49, %v48
    %v57 = vpack.c.b16 %v51, %v50
    %v58 = vpack.c.b16 %v53, %v52
    %v59 = vpack.c.b16 %v55, %v54
    %vm60 = vcmask 261120
    %v62 = vsel %vm60, %v39, 0
    %v65 = vsel %vm60, %v56, 0
    %v68 = vsel %vm60, %v57, 0
    %v71 = vsel %vm60, %v58, 0
    %v74 = vsel %vm60, %v59, 0
    %76 = vmatprep.subr.bf16.mxu0 0
    %77 = vmatpush1.bf16.xpose.msra.mxu0 0
    %78 = vmatprep.subr.bf16.mxu0 0
    %79 = vmatpush1.bf16.xpose.msra.mxu0 0
    %80 = vmatprep.subr.bf16.mxu0 0
    %81 = vmatpush1.bf16.xpose.msra.mxu0 0
    %82 = vmatprep.subr.bf16.mxu0 0
    %83 = vmatpush1.bf16.xpose.msra.mxu0 0
    %84 = vmatprep.subr.bf16.mxu0 0
    %85 = vmatpush1.bf16.xpose.msra.mxu0 %v74
    %86 = vmatprep.subr.bf16.mxu0 0
    %87 = vmatpush1.bf16.xpose.msra.mxu0 %v71
    %88 = vmatprep.subr.bf16.mxu0 0
    %89 = vmatpush1.bf16.xpose.msra.mxu0 %v68
    %90 = vmatprep.subr.bf16.mxu0 0
    %91 = vmatpush1.bf16.xpose.msra.mxu0 %v65
    %92 = vmatprep.subr.bf16.mxu0 0
    %93 = vmatpush2.bf16.xpose.msra.mxu0 0
    %94 = vmatprep.subr.bf16.mxu0 0
    %95 = vmatpush2.bf16.xpose.msra.mxu0 0
    %96 = vmatprep.subr.bf16.mxu0 0
    %97 = vmatpush2.bf16.xpose.msra.mxu0 0
    %98 = vmatprep.subr.bf16.mxu0 0
    %99 = vmatpush2.bf16.xpose.msra.mxu0 0
    %100 = vmatprep.subr.bf16.mxu0 0
    %101 = vmatpush2.bf16.xpose.msra.mxu0 0
    %102 = vmatprep.subr.bf16.mxu0 0
    %103 = vmatpush2.bf16.xpose.msra.mxu0 0
    %104 = vmatprep.subr.bf16.mxu0 0
    %105 = vmatpush2.bf16.xpose.msra.mxu0 0
    %106 = vmatprep.subr.bf16.mxu0 0
    %107 = vmatpush2.bf16.xpose.msra.mxu0 0
    %108 = vmatprep.mubr.bf16.mxu0 0
    %109 = vmatmul.mubr.bf16.gmra.mxu0 %v62
    %v110 = vpop.f32.mrf.mxu0
    %v111 = vadd.f32 0.0, %v110
    %v112 = vpop.f32.mrf.mxu0
    %v113 = vpop.f32.mrf.mxu0
    %v114 = vadd.f32 0.0, %v113
    %v115 = vpop.f32.mrf.mxu0
    %116 = vdwg.mxu0
    %v117 = vadd.f32 %v23, %v111
    %v118 = vadd.f32 %v24, %v114
    %vm119 = vcmask 523264
    %120 = vst.msk [vmem:[#allocation2] sm:$0xff] %vm119, %v117
    %121 = vst.msk [vmem:[#allocation2 + $0x8] sm:$0xff] %vm119, %v118
    // Predicated region
    $region18: #{tpu_custom_call.1} parent=1 // pred_check
      %p122 = pneg %p16
    $region19: #{tpu_custom_call.1} parent=1 // pred_check_branch
      %124 = sbr.rel (%p122) target = $region21
    $region20: #{tpu_custom_call.1} parent=1 // pred_region
      %v125 = vld [vmem:[#allocation2] sm:$0xff]
      %v126 = vld [vmem:[#allocation2 + $0x8] sm:$0xff]
      %v127 = vld [vmem:[%s2] sm:$0x1]
      %v129 = vlaneseq
      %v130 = vshrl.u32 %v129, 7
      %v131 = vsub.s32 0, %v130
      %v132 = vrot.slane %v127, %v131
      %v134 = vadd.f32 %v125, %v132
      %v135 = vadd.f32 %v126, %v132
      %v136 = vmul.f32 %v134, 0.5
      %v137 = vmul.f32 %v135, 0.5
      %v138 = vmul.f32 %v134, 0.044715
      %v139 = vmul.f32 %v135, 0.044715
      %v140 = vmul.f32 %v138, %v134
      %v141 = vmul.f32 %v139, %v135
      %v142 = vmul.f32 %v140, %v134
      %v143 = vmul.f32 %v141, %v135
      %v144 = vadd.f32 %v134, %v142
      %v145 = vadd.f32 %v135, %v143
      %v146 = vmul.f32 %v144, 0.7978846
      %v147 = vmul.f32 %v145, 0.7978846
      %v148 = vtanh.pop %v146
      %v149 = vtanh.pop %v147
      %v150 = vadd.f32 %v148, 1.0
      %v151 = vadd.f32 %v149, 1.0
      %v152 = vmul.f32 %v136, %v150
      %v153 = vmul.f32 %v137, %v151
      %v154 = vpack.c.bf16 %v153, %v152
      %v156 = vunpack.c.l.b16 %v154
      %v157 = vunpack.c.h.b16 %v154
      %v158 = vpack.c.b16 %v156, %v156
      %v159 = vpack.c.b16 %v157, %v157
      %vm162 = vcmask 519168
      %163 = vst.msk [vmem:[#allocation3] sm:$0xf] %vm162, %v158
      %164 = vst.msk [vmem:[#allocation3 + $0x4] sm:$0xf] %vm162, %v159
    $region21: #{tpu_custom_call.1} parent=1 // pred_fallthru
      _
    // Predicated region
    $region22: #{tpu_custom_call.1} parent=1 // pred_check
      _
    $region23: #{tpu_custom_call.1} parent=1 // pred_check_branch
      %166 = sbr.rel (0) target = $region25
    $region24: #{tpu_custom_call.1} parent=1 // pred_region
      %s168 = ssub.s32 128, 128
      %169 = vsyncadd [#allocation4], %s168
      %s170 = sshll.u32 [#allocation3], 4
      %s171 = int_to_ptr.vmem [resolvable:$true] %s170
      %176 = dma.vmem_to_hbm [thread:$0]  %s171, 128, %s3, [#allocation4], 64, 64, 4
    $region25: #{tpu_custom_call.1} parent=1 // pred_fallthru
      _
    // Predicated region
    $region26: #{tpu_custom_call.1} parent=1 // pred_check
      _
    $region27: #{tpu_custom_call.1} parent=1 // pred_check_branch
      %178 = sbr.rel (0) target = $region29
    $region28: #{tpu_custom_call.1} parent=1 // pred_region
      %179 = dma.done [#allocation4], 128
    $region29: #{tpu_custom_call.1} parent=1 // pred_fallthru
      _
    %180 = vsyncpa [#allocation4], 1

</llo_original>
